<compile_context>
chip_gen: v7x
topology: tpu7x:2x2x1
jax: 0.10.0
libtpu: 0.0.40
codegen_flags: <defaults>
</compile_context>

<pallas_src>
import numpy as np
import jax
import jax.numpy as jnp
from jax.experimental import pallas as pl
from jax.experimental.pallas import tpu as pltpu


def _round_up(x, m):
    return ((x + m - 1) // m) * m


def _cdiv(a, b):
    return -(-a // b)


# ---------------------------------------------------------------------------
# Pallas kernel
# ---------------------------------------------------------------------------
def tfn_kernel(x_ref, wc_ref, bc_ref, w1_ref, b1_ref, w2_ref, b2_ref,
               w3_ref, b3_ref, out_ref):
    f32 = jnp.float32
    cdt = wc_ref.dtype                       # MXU operand dtype (f32 or bf16)
    kp = wc_ref.shape[1] // 3                # padded fusion width (multiple of 128)

    x = x_ref[...].astype(cdt)               # (tb, Dt+Dg+Dn) packed modalities

    # Single fused condense: "cat([ones, linear(x)])" + broadcast onto the
    # zero-padded fusion axis for all three modalities in one matmul.
    exp = jnp.dot(x, wc_ref[...], preferred_element_type=f32) + bc_ref[...]   # (tb, 3*kp)

    # 3-way outer product == element-wise triple product of the three expanded
    # views (free lane-tile-aligned slices).  Padded lanes are exactly zero.
    fusion = exp[:, 0:kp] * exp[:, kp:2 * kp] * exp[:, 2 * kp:3 * kp]         # (tb, kp)

    # post_fusion_layer_1 / _2 with ReLU (f32 accumulation on the MXU).
    y1 = jnp.maximum(
        jnp.dot(fusion.astype(cdt), w1_ref[...], preferred_element_type=f32) + b1_ref[...], 0.0)
    y2 = jnp.maximum(
        jnp.dot(y1.astype(cdt), w2_ref[...], preferred_element_type=f32) + b2_ref[...], 0.0)

    # post_fusion_layer_3: (P -> 1) projection on the VPU + lane reduce.
    z = jnp.sum(y2 * w3_ref[...], axis=-1, keepdims=True) + b3_ref[...]       # (tb, 1)

    # Lane-dense output: move the per-row scalars from sublanes to lanes via
    # small (128,1)->(1,128) transposes (XLU) and write full 128-lane rows.
    n_chunks = out_ref.shape[0]              # == tb // 128 (static)
    for c in range(n_chunks):
        out_ref[pl.ds(c, 1), :] = z[c * 128:(c + 1) * 128, :].T


# ---------------------------------------------------------------------------
# Parameter construction (deterministic, PyTorch-layout (out, in) weights)
# ---------------------------------------------------------------------------
def init_params(key, text_dim, graph_dim, num_dim, ct, cg, cn, pf_dim):
    ks = jax.random.split(key, 12)

    def lin(kw, kb, din, dout):
        w = jax.random.normal(kw, (dout, din), jnp.float32) * 0.1
        b = jax.random.normal(kb, (dout,), jnp.float32) * 0.1
        return w, b

    fdim = (ct + 1) * (cg + 1) * (cn + 1)
    wt, bt = lin(ks[0], ks[1], text_dim, ct)
    wg, bg = lin(ks[2], ks[3], graph_dim, cg)
    wn, bn = lin(ks[4], ks[5], num_dim, cn)
    w1, b1 = lin(ks[6], ks[7], fdim, pf_dim)
    w2, b2 = lin(ks[8], ks[9], pf_dim, pf_dim)
    w3, b3 = lin(ks[10], ks[11], pf_dim, 1)
    return dict(wt=wt, bt=bt, wg=wg, bg=bg, wn=wn, bn=bn,
                w1=w1, b1=b1, w2=w2, b2=b2, w3=w3, b3=b3)


# ---------------------------------------------------------------------------
# One-time weight prep (hoisted out of the per-call path)
# ---------------------------------------------------------------------------
def prep_kernel_params(p, text_dim, graph_dim, num_dim, ct, cg, cn, pf_dim,
                       matmul_dtype=jnp.float32):
    """Fold ones-augmentation + fusion-axis broadcast into the condense weights,
    block-diagonal pack the three modalities into one matrix, and zero-pad the
    fused K dimension to a multiple of 128."""
    T, G, N = ct + 1, cg + 1, cn + 1
    K = G * N * T
    K_pad = _round_up(K, 128)

    # Flattened fusion index j = (g*N + n)*T + t (matches the PyTorch bmm/view).
    k = np.arange(K_pad)
    valid = (k < K).astype(np.float32)
    g_idx = np.where(k < K, k // (N * T), 0)
    n_idx = np.where(k < K, (k // T) % N, 0)
    t_idx = np.where(k < K, k % T, 0)

    def one_hot(idx, depth):
        e = np.zeros((depth, K_pad), np.float32)
        e[idx, np.arange(K_pad)] = valid
        return e

    Et, Eg, En = one_hot(t_idx, T), one_hot(g_idx, G), one_hot(n_idx, N)

    def condense_expand(w, b, E):
        # torch (out,in) -> (in, out+1) with a leading zero column; bias gets a
        # leading 1 (== cat([ones, x @ W.T + b])).  Then broadcast onto the
        # padded fusion axis via the one-hot expansion (exact column copies).
        wT = np.asarray(w, np.float32).T
        w_aug = np.concatenate([np.zeros((wT.shape[0], 1), np.float32), wT], axis=1)
        b_aug = np.concatenate([np.ones((1,), np.float32), np.asarray(b, np.float32)])[None, :]
        return w_aug @ E, b_aug @ E

    wt_e, bt_e = condense_expand(p['wt'], p['bt'], Et)
    wg_e, bg_e = condense_expand(p['wg'], p['bg'], Eg)
    wn_e, bn_e = condense_expand(p['wn'], p['bn'], En)

    # Block-diagonal pack: rows follow the wrapper-side concat [text|graph|num],
    # columns are three K_pad-wide (128-aligned) blocks, one per modality.
    Dt, Dg, Dn = text_dim, graph_dim, num_dim
    Dtot = Dt + Dg + Dn
    wc = np.zeros((Dtot, 3 * K_pad), np.float32)
    wc[:Dt, 0:K_pad] = wt_e
    wc[Dt:Dt + Dg, K_pad:2 * K_pad] = wg_e
    wc[Dt + Dg:, 2 * K_pad:3 * K_pad] = wn_e
    bc = np.concatenate([bt_e, bg_e, bn_e], axis=1)          # (1, 3*K_pad)

    w1 = np.zeros((K_pad, pf_dim), np.float32)
    w1[:K] = np.asarray(p['w1'], np.float32).T
    b1 = np.asarray(p['b1'], np.float32)[None, :]
    w2 = np.asarray(p['w2'], np.float32).T
    b2 = np.asarray(p['b2'], np.float32)[None, :]
    w3 = np.asarray(p['w3'], np.float32)                     # (1, P) row
    b3 = np.asarray(p['b3'], np.float32)[None, :]            # (1, 1)

    jp = lambda a, dt: jnp.asarray(a).astype(dt)
    return (jp(wc, matmul_dtype), jp(bc, jnp.float32),
            jp(w1, matmul_dtype), jp(b1, jnp.float32),
            jp(w2, matmul_dtype), jp(b2, jnp.float32),
            jp(w3, jnp.float32), jp(b3, jnp.float32))


# ---------------------------------------------------------------------------
# Wrapper: prep once, return a jitted forward over activations only
# ---------------------------------------------------------------------------
def make_tfn_forward(params, text_dim, graph_dim, num_dim, ct, cg, cn, pf_dim, *,
                     tile_b=2048, matmul_dtype=jnp.float32):
    kparams = prep_kernel_params(params, text_dim, graph_dim, num_dim,
                                 ct, cg, cn, pf_dim, matmul_dtype)

    def fwd(text_x, graph_x, num_x):
        B = text_x.shape[0]
        # Pack the three narrow modalities into one lane-friendlier activation.
        x = jnp.concatenate([text_x.astype(jnp.float32),
                             graph_x.astype(jnp.float32),
                             num_x.astype(jnp.float32)], axis=1)
        Dtot = x.shape[1]

        # Batch tiling: tiles are multiples of 128 rows (lane-dense output).
        q = _cdiv(B, 128)                       # number of 128-row output chunks
        n_steps = _cdiv(q * 128, tile_b)
        if n_steps == 1 and q >= 2:
            n_steps = 2                         # >=2 grid steps -> both TCs on v7x
        cps = _cdiv(q, n_steps)                 # 128-row chunks per grid step
        tb = cps * 128
        grid = _cdiv(q, cps)
        B_pad = grid * tb                       # pads < one tile of zero rows
        if B_pad != B:
            x = jnp.pad(x, ((0, B_pad - B), (0, 0)))

        res_spec = lambda a: pl.BlockSpec(a.shape, lambda i: (0, 0))  # VMEM-resident

        out = pl.pallas_call(
            tfn_kernel,
            out_shape=jax.ShapeDtypeStruct((grid, cps, 128), jnp.float32),
            grid=(grid,),
            in_specs=[pl.BlockSpec((tb, Dtot), lambda i: (i, 0))]
                     + [res_spec(a) for a in kparams],
            out_specs=pl.BlockSpec((None, cps, 128), lambda i: (i, 0, 0)),
            compiler_params=pltpu.CompilerParams(
                dimension_semantics=("parallel",),
                vmem_limit_bytes=32 * 1024 * 1024),
        )(x, *kparams)
        return out.reshape(B_pad, 1)[:B]

    return jax.jit(fwd)


# ---------------------------------------------------------------------------
# Pure-JAX reference (mirrors the PyTorch forward exactly, eval-mode dropout)
# ---------------------------------------------------------------------------
def reference_forward(text_x, graph_x, num_x, p):
    B = text_x.shape[0]
    ones = jnp.ones((B, 1), jnp.float32)
    _t = jnp.concatenate([ones, text_x @ p['wt'].T + p['bt']], axis=1)
    _g = jnp.concatenate([ones, graph_x @ p['wg'].T + p['bg']], axis=1)
    _n = jnp.concatenate([ones, num_x @ p['wn'].T + p['bn']], axis=1)
    gn = jnp.einsum('bg,bn->bgn', _g, _n).reshape(B, -1)
    fusion = jnp.einsum('bk,bt->bkt', gn, _t).reshape(B, -1)
    y1 = jax.nn.relu(fusion @ p['w1'].T + p['b1'])
    y2 = jax.nn.relu(y1 @ p['w2'].T + p['b2'])
    return y2 @ p['w3'].T + p['b3']


if __name__ == "__main__":
    # Small shapes consistent with the module's forward contract.
    B = 2
    text_dim, graph_dim, num_dim = 16, 12, 8
    ct, cg, cn = 4, 4, 4
    pf_dim = 32

    key = jax.random.PRNGKey(0)
    k_t, k_g, k_n, k_p = jax.random.split(key, 4)
    text_x = jax.random.normal(k_t, (B, text_dim), jnp.float32)
    graph_x = jax.random.normal(k_g, (B, graph_dim), jnp.float32)
    num_x = jax.random.normal(k_n, (B, num_dim), jnp.float32)

    params = init_params(k_p, text_dim, graph_dim, num_dim, ct, cg, cn, pf_dim)

    # Primary check: small batch, single grid step.
    fwd = make_tfn_forward(params, text_dim, graph_dim, num_dim, ct, cg, cn, pf_dim)
    out = jax.block_until_ready(fwd(text_x, graph_x, num_x))
    ref = reference_forward(text_x, graph_x, num_x, params)
    np.testing.assert_allclose(np.asarray(out), np.asarray(ref), rtol=1e-4, atol=1e-4)
    assert out.shape == (B, 1)

    # Secondary check: larger batch, default tiling -> 2 grid steps (v7x split).
    B2 = 300
    k_t2, k_g2, k_n2 = jax.random.split(jax.random.PRNGKey(1), 3)
    text_x2 = jax.random.normal(k_t2, (B2, text_dim), jnp.float32)
    graph_x2 = jax.random.normal(k_g2, (B2, graph_dim), jnp.float32)
    num_x2 = jax.random.normal(k_n2, (B2, num_dim), jnp.float32)
    out2 = jax.block_until_ready(fwd(text_x2, graph_x2, num_x2))
    ref2 = reference_forward(text_x2, graph_x2, num_x2, params)
    np.testing.assert_allclose(np.asarray(out2), np.asarray(ref2), rtol=1e-4, atol=1e-4)
    assert out2.shape == (B2, 1)

    # Tertiary check: small tiles -> multi-step pipelined grid (3 steps).
    fwd3 = make_tfn_forward(params, text_dim, graph_dim, num_dim, ct, cg, cn, pf_dim,
                            tile_b=128)
    out3 = jax.block_until_ready(fwd3(text_x2, graph_x2, num_x2))
    np.testing.assert_allclose(np.asarray(out3), np.asarray(ref2), rtol=1e-4, atol=1e-4)

    print("KERNEL_OK")
</pallas_src>

<mosaic_0001>
module attributes {stable_mosaic.version = 11 : i64} {
  func.func @tfn_kernel(%arg0: i32, %arg1: memref<128x36xf32, #tpu.memory_space<vmem>>, %arg2: memref<36x384xf32, #tpu.memory_space<vmem>>, %arg3: memref<1x384xf32, #tpu.memory_space<vmem>>, %arg4: memref<128x32xf32, #tpu.memory_space<vmem>>, %arg5: memref<1x32xf32, #tpu.memory_space<vmem>>, %arg6: memref<32x32xf32, #tpu.memory_space<vmem>>, %arg7: memref<1x32xf32, #tpu.memory_space<vmem>>, %arg8: memref<1x32xf32, #tpu.memory_space<vmem>>, %arg9: memref<1x1xf32, #tpu.memory_space<vmem>>, %arg10: memref<1x1x128xf32, #tpu.memory_space<vmem>>) attributes {dimension_semantics = [#tpu.dimension_semantics<parallel>], iteration_bounds = array<i64: 1>, scalar_prefetch = 0 : i64, scratch_operands = 0 : i64, tpu.core_type = #tpu.core_type<tc>, window_params = [{transform_indices = @transform_0, window_bounds = array<i64: 128, 36>}, {pipeline_mode = #tpu.pipeline_mode<synchronous>, transform_indices = @transform_1, window_bounds = array<i64: 36, 384>}, {pipeline_mode = #tpu.pipeline_mode<synchronous>, transform_indices = @transform_2, window_bounds = array<i64: 1, 384>}, {pipeline_mode = #tpu.pipeline_mode<synchronous>, transform_indices = @transform_3, window_bounds = array<i64: 128, 32>}, {pipeline_mode = #tpu.pipeline_mode<synchronous>, transform_indices = @transform_4, window_bounds = array<i64: 1, 32>}, {pipeline_mode = #tpu.pipeline_mode<synchronous>, transform_indices = @transform_5, window_bounds = array<i64: 32, 32>}, {pipeline_mode = #tpu.pipeline_mode<synchronous>, transform_indices = @transform_6, window_bounds = array<i64: 1, 32>}, {pipeline_mode = #tpu.pipeline_mode<synchronous>, transform_indices = @transform_7, window_bounds = array<i64: 1, 32>}, {pipeline_mode = #tpu.pipeline_mode<synchronous>, transform_indices = @transform_8, window_bounds = array<i64: 1, 1>}, {transform_indices = @transform_9, window_bounds = array<i64: 1, 1, 128>}]} {
    %c0 = arith.constant 0 : index
    %c0_0 = arith.constant 0 : index
    %0 = vector.load %arg1[%c0, %c0_0] : memref<128x36xf32, #tpu.memory_space<vmem>>, vector<128x36xf32>
    %c0_1 = arith.constant 0 : index
    %c0_2 = arith.constant 0 : index
    %1 = vector.load %arg2[%c0_1, %c0_2] : memref<36x384xf32, #tpu.memory_space<vmem>>, vector<36x384xf32>
    %cst = arith.constant dense<0.000000e+00> : vector<128x384xf32>
    %2 = tpu.matmul %0, %1, %cst {dimension_numbers = #tpu.dot_dimension_numbers<[1], [0], [0], [1], [0, 0, 1, 1], [], []>} : vector<128x36xf32>, vector<36x384xf32>, vector<128x384xf32> -> vector<128x384xf32>
    %c0_3 = arith.constant 0 : index
    %c0_4 = arith.constant 0 : index
    %3 = vector.load %arg3[%c0_3, %c0_4] : memref<1x384xf32, #tpu.memory_space<vmem>>, vector<1x384xf32>
    %4 = vector.broadcast %3 : vector<1x384xf32> to vector<128x384xf32>
    %5 = arith.addf %2, %4 : vector<128x384xf32>
    %6 = vector.extract_strided_slice %5 {offsets = [0, 0], sizes = [128, 128], strides = [1, 1]} : vector<128x384xf32> to vector<128x128xf32>
    %7 = vector.extract_strided_slice %5 {offsets = [0, 128], sizes = [128, 128], strides = [1, 1]} : vector<128x384xf32> to vector<128x128xf32>
    %8 = arith.mulf %6, %7 : vector<128x128xf32>
    %9 = vector.extract_strided_slice %5 {offsets = [0, 256], sizes = [128, 128], strides = [1, 1]} : vector<128x384xf32> to vector<128x128xf32>
    %10 = arith.mulf %8, %9 : vector<128x128xf32>
    %c0_5 = arith.constant 0 : index
    %c0_6 = arith.constant 0 : index
    %11 = vector.load %arg4[%c0_5, %c0_6] : memref<128x32xf32, #tpu.memory_space<vmem>>, vector<128x32xf32>
    %cst_7 = arith.constant dense<0.000000e+00> : vector<128x32xf32>
    %12 = tpu.matmul %10, %11, %cst_7 {dimension_numbers = #tpu.dot_dimension_numbers<[1], [0], [0], [1], [0, 0, 1, 1], [], []>} : vector<128x128xf32>, vector<128x32xf32>, vector<128x32xf32> -> vector<128x32xf32>
    %c0_8 = arith.constant 0 : index
    %c0_9 = arith.constant 0 : index
    %13 = vector.load %arg5[%c0_8, %c0_9] : memref<1x32xf32, #tpu.memory_space<vmem>>, vector<1x32xf32>
    %14 = vector.broadcast %13 : vector<1x32xf32> to vector<128x32xf32>
    %15 = arith.addf %12, %14 : vector<128x32xf32>
    %cst_10 = arith.constant 0.000000e+00 : f32
    %16 = vector.broadcast %cst_10 : f32 to vector<128x32xf32>
    %17 = arith.maximumf %15, %16 : vector<128x32xf32>
    %c0_11 = arith.constant 0 : index
    %c0_12 = arith.constant 0 : index
    %18 = vector.load %arg6[%c0_11, %c0_12] : memref<32x32xf32, #tpu.memory_space<vmem>>, vector<32x32xf32>
    %cst_13 = arith.constant dense<0.000000e+00> : vector<128x32xf32>
    %19 = tpu.matmul %17, %18, %cst_13 {dimension_numbers = #tpu.dot_dimension_numbers<[1], [0], [0], [1], [0, 0, 1, 1], [], []>} : vector<128x32xf32>, vector<32x32xf32>, vector<128x32xf32> -> vector<128x32xf32>
    %c0_14 = arith.constant 0 : index
    %c0_15 = arith.constant 0 : index
    %20 = vector.load %arg7[%c0_14, %c0_15] : memref<1x32xf32, #tpu.memory_space<vmem>>, vector<1x32xf32>
    %21 = vector.broadcast %20 : vector<1x32xf32> to vector<128x32xf32>
    %22 = arith.addf %19, %21 : vector<128x32xf32>
    %cst_16 = arith.constant 0.000000e+00 : f32
    %23 = vector.broadcast %cst_16 : f32 to vector<128x32xf32>
    %24 = arith.maximumf %22, %23 : vector<128x32xf32>
    %c0_17 = arith.constant 0 : index
    %c0_18 = arith.constant 0 : index
    %25 = vector.load %arg8[%c0_17, %c0_18] : memref<1x32xf32, #tpu.memory_space<vmem>>, vector<1x32xf32>
    %26 = vector.broadcast %25 : vector<1x32xf32> to vector<128x32xf32>
    %27 = arith.mulf %24, %26 : vector<128x32xf32>
    %cst_19 = arith.constant dense<0.000000e+00> : vector<128xf32>
    %28 = vector.multi_reduction <add>, %27, %cst_19 [1] : vector<128x32xf32> to vector<128xf32>
    %29 = vector.shape_cast %28 : vector<128xf32> to vector<128x1xf32>
    %c0_20 = arith.constant 0 : index
    %c0_21 = arith.constant 0 : index
    %30 = vector.load %arg9[%c0_20, %c0_21] : memref<1x1xf32, #tpu.memory_space<vmem>>, vector<1x1xf32>
    %31 = vector.broadcast %30 : vector<1x1xf32> to vector<128x1xf32>
    %32 = arith.addf %29, %31 : vector<128x1xf32>
    %33 = tpu.transpose %32, [1, 0] : vector<128x1xf32> -> vector<1x128xf32>
    %c0_22 = arith.constant 0 : index
    %c0_23 = arith.constant 0 : index
    %c0_24 = arith.constant 0 : index
    %34 = vector.load %arg10[%c0_22, %c0_23, %c0_24] : memref<1x1x128xf32, #tpu.memory_space<vmem>>, vector<1x1x128xf32>
    %35 = vector.shape_cast %34 : vector<1x1x128xf32> to vector<1x128xf32>
    %36 = vector.shape_cast %33 : vector<1x128xf32> to vector<1x1x128xf32>
    tpu.vector_store %arg10[%c0_22, %c0_23, %c0_24], %36 {strides = array<i32>} : memref<1x1x128xf32, #tpu.memory_space<vmem>>, vector<1x1x128xf32>,
    return
  }
  func.func @transform_0(%arg0: i32) -> (i32, i32) {
    %c0_i32 = arith.constant 0 : i32
    %c0_i32_0 = arith.constant 0 : i32
    return %arg0, %c0_i32 : i32, i32
  }
  func.func @transform_1(%arg0: i32) -> (i32, i32) {
    %c0_i32 = arith.constant 0 : i32
    %c0_i32_0 = arith.constant 0 : i32
    %c0_i32_1 = arith.constant 0 : i32
    return %c0_i32, %c0_i32_0 : i32, i32
  }
  func.func @transform_2(%arg0: i32) -> (i32, i32) {
    %c0_i32 = arith.constant 0 : i32
    %c0_i32_0 = arith.constant 0 : i32
    %c0_i32_1 = arith.constant 0 : i32
    return %c0_i32, %c0_i32_0 : i32, i32
  }
  func.func @transform_3(%arg0: i32) -> (i32, i32) {
    %c0_i32 = arith.constant 0 : i32
    %c0_i32_0 = arith.constant 0 : i32
    %c0_i32_1 = arith.constant 0 : i32
    return %c0_i32, %c0_i32_0 : i32, i32
  }
  func.func @transform_4(%arg0: i32) -> (i32, i32) {
    %c0_i32 = arith.constant 0 : i32
    %c0_i32_0 = arith.constant 0 : i32
    %c0_i32_1 = arith.constant 0 : i32
    return %c0_i32, %c0_i32_0 : i32, i32
  }
  func.func @transform_5(%arg0: i32) -> (i32, i32) {
    %c0_i32 = arith.constant 0 : i32
    %c0_i32_0 = arith.constant 0 : i32
    %c0_i32_1 = arith.constant 0 : i32
    return %c0_i32, %c0_i32_0 : i32, i32
  }
  func.func @transform_6(%arg0: i32) -> (i32, i32) {
    %c0_i32 = arith.constant 0 : i32
    %c0_i32_0 = arith.constant 0 : i32
    %c0_i32_1 = arith.constant 0 : i32
    return %c0_i32, %c0_i32_0 : i32, i32
  }
  func.func @transform_7(%arg0: i32) -> (i32, i32) {
    %c0_i32 = arith.constant 0 : i32
    %c0_i32_0 = arith.constant 0 : i32
    %c0_i32_1 = arith.constant 0 : i32
    return %c0_i32, %c0_i32_0 : i32, i32
  }
  func.func @transform_8(%arg0: i32) -> (i32, i32) {
    %c0_i32 = arith.constant 0 : i32
    %c0_i32_0 = arith.constant 0 : i32
    %c0_i32_1 = arith.constant 0 : i32
    return %c0_i32, %c0_i32_0 : i32, i32
  }
  func.func @transform_9(%arg0: i32) -> (i32, i32, i32) {
    %c0_i32 = arith.constant 0 : i32
    %c0_i32_0 = arith.constant 0 : i32
    %c0_i32_1 = arith.constant 0 : i32
    return %arg0, %c0_i32, %c0_i32_0 : i32, i32, i32
  }
}

</mosaic_0001>

<llo_original>
// kernel: fwd.1
$region0: #{fwd.1}
  #allocation0 [shape = 'u32[]', space=smem, size = 0x4, offset = 0x4, fixed_abs, tag = 'smem constant byte address 0x4 - core index']
  #allocation1 [shape = 'u32[144,128]{1,0:T(1,128)}', space=vmem, size = 0x12000, scoped, tag = 'internal scratch']
  #allocation2 [shape = 'f32[1,1]{1,0:T(1,128)S(1)}', space=vmem, size = 0x200, scoped, tag = 'scoped memory for fwd.1']
  %s0 = inlined_call_operand.vmem [shape: f32[128,36], index: 0, kind: input, shape index: {}]
  %s1 = inlined_call_operand.hbm [shape: f32[36,384], index: 1, kind: input, shape index: {}]
  %s2 = inlined_call_operand.hbm [shape: f32[1,384], index: 2, kind: input, shape index: {}]
  %s3 = inlined_call_operand.vmem [shape: f32[128,32], index: 3, kind: input, shape index: {}]
  %s4 = inlined_call_operand.hbm [shape: f32[1,32], index: 4, kind: input, shape index: {}]
  %s5 = inlined_call_operand.vmem [shape: f32[32,32], index: 5, kind: input, shape index: {}]
  %s6 = inlined_call_operand.vmem [shape: f32[1,32], index: 6, kind: input, shape index: {}]
  %s7 = inlined_call_operand.vmem [shape: f32[1,32], index: 7, kind: input, shape index: {}]
  %s8 = inlined_call_operand.<no memory space> [shape: f32[1,1], index: 8, kind: input, shape index: {}]
  %s9 = inlined_call_operand.vmem [shape: f32[1,1,128], index: 9, kind: output, shape index: {}]
  %s10 = sld [smem:[#allocation0]]
  $region58: #{fwd.1} parent=0
    _
  %s12 = ssub.s32 1, %s10
  %s13 = scalar_select 0, %s12, %s10
  %v14 = vstv %s8
  %15 = vst [vmem:[#allocation2] sm:$0x1] %v14
  $region1: #{fwd.1} parent=0
    #allocation3 [shape = 'u8[61440]{0}', space=vmem, size = 0xf000, scoped, tag = 'input window, operand 1, single buffered']
    #allocation4 [shape = 's32[1]{0}', space=sflag, size = 0x4, scoped, tag = 'scoped memory for fwd.1']
    #allocation5 [shape = 'u8[1536]{0}', space=vmem, size = 0x800, scoped, tag = 'input window, operand 2, single buffered']
    #allocation6 [shape = 's32[1]{0}', space=sflag, size = 0x4, scoped, tag = 'scoped memory for fwd.1']
    #allocation7 [shape = 'u8[512]{0}', space=vmem, size = 0x400, scoped, tag = 'input window, operand 4, single buffered']
    %16 = vsyncpa [#allocation4], 0
    %17 = vsyncpa [#allocation6], 0
    // Predicated region
    $region2: #{fwd.1} parent=1 // pred_check
      _
    $region3: #{fwd.1} parent=1 // pred_check_branch
      %19 = sbr.rel (0) target = $region5
    $region4: #{fwd.1} parent=1 // pred_region
      _
    $region5: #{fwd.1} parent=1 // pred_fallthru
      _
    // Predicated region
    $region6: #{fwd.1} parent=1 // pred_check
      _
    $region7: #{fwd.1} parent=1 // pred_check_branch
      %21 = sbr.rel (0) target = $region9
    $region8: #{fwd.1} parent=1 // pred_region
      %s23 = ssub.s32 1920, 1920
      %24 = vsyncadd [#allocation4], %s23
      %s25 = sshll.u32 [#allocation3], 4
      %s26 = int_to_ptr.vmem [resolvable:$true] %s25
      %31 = dma.hbm_to_vmem [thread:$0]  %s1, 1920, %s26, [#allocation4], 384, 384, 24
    $region9: #{fwd.1} parent=1 // pred_fallthru
      _
    // Predicated region
    $region10: #{fwd.1} parent=1 // pred_check
      _
    $region11: #{fwd.1} parent=1 // pred_check_branch
      %33 = sbr.rel (0) target = $region13
    $region12: #{fwd.1} parent=1 // pred_region
      %s35 = ssub.s32 48, 48
      %36 = vsyncadd [#allocation6], %s35
      %s38 = sshll.u32 [#allocation5], 4
      %s39 = int_to_ptr.vmem [resolvable:$true] %s38
      %41 = dma.hbm_to_vmem [thread:$0]  %s2, 48, %s39, [#allocation6]
    $region13: #{fwd.1} parent=1 // pred_fallthru
      _
    // Predicated region
    $region14: #{fwd.1} parent=1 // pred_check
      _
    $region15: #{fwd.1} parent=1 // pred_check_branch
      %43 = sbr.rel (0) target = $region17
    $region16: #{fwd.1} parent=1 // pred_region
      _
    $region17: #{fwd.1} parent=1 // pred_fallthru
      _
    // Predicated region
    $region18: #{fwd.1} parent=1 // pred_check
      _
    $region19: #{fwd.1} parent=1 // pred_check_branch
      %45 = sbr.rel (0) target = $region21
    $region20: #{fwd.1} parent=1 // pred_region
      %s47 = ssub.s32 16, 16
      %48 = vsyncadd [#allocation6], %s47
      %s50 = sshll.u32 [#allocation7], 4
      %s51 = int_to_ptr.vmem [resolvable:$true] %s50
      %53 = dma.hbm_to_vmem [thread:$0]  %s4, 16, %s51, [#allocation6]
    $region21: #{fwd.1} parent=1 // pred_fallthru
      _
    // Predicated region
    $region22: #{fwd.1} parent=1 // pred_check
      _
    $region23: #{fwd.1} parent=1 // pred_check_branch
      %55 = sbr.rel (0) target = $region25
    $region24: #{fwd.1} parent=1 // pred_region
      _
    $region25: #{fwd.1} parent=1 // pred_fallthru
      _
    // Predicated region
    $region26: #{fwd.1} parent=1 // pred_check
      _
    $region27: #{fwd.1} parent=1 // pred_check_branch
      %57 = sbr.rel (0) target = $region29
    $region28: #{fwd.1} parent=1 // pred_region
      _
    $region29: #{fwd.1} parent=1 // pred_fallthru
      _
    // Predicated region
    $region30: #{fwd.1} parent=1 // pred_check
      _
    $region31: #{fwd.1} parent=1 // pred_check_branch
      %59 = sbr.rel (0) target = $region33
    $region32: #{fwd.1} parent=1 // pred_region
      _
    $region33: #{fwd.1} parent=1 // pred_fallthru
      _
    // Predicated region
    $region34: #{fwd.1} parent=1 // pred_check
      _
    $region35: #{fwd.1} parent=1 // pred_check_branch
      %61 = sbr.rel (0) target = $region37
    $region36: #{fwd.1} parent=1 // pred_region
      _
    $region37: #{fwd.1} parent=1 // pred_fallthru
      _
    // Predicated region
    $region38: #{fwd.1} parent=1 // pred_check
      _
    $region39: #{fwd.1} parent=1 // pred_check_branch
      %63 = sbr.rel (0) target = $region41
    $region40: #{fwd.1} parent=1 // pred_region
      %64 = dma.done [#allocation4], 1920
    $region41: #{fwd.1} parent=1 // pred_fallthru
      _
    // Predicated region
    $region42: #{fwd.1} parent=1 // pred_check
      _
    $region43: #{fwd.1} parent=1 // pred_check_branch
      %66 = sbr.rel (0) target = $region45
    $region44: #{fwd.1} parent=1 // pred_region
      %67 = dma.done [#allocation6], 48
    $region45: #{fwd.1} parent=1 // pred_fallthru
      _
    // Predicated region
    $region46: #{fwd.1} parent=1 // pred_check
      _
    $region47: #{fwd.1} parent=1 // pred_check_branch
      %69 = sbr.rel (0) target = $region49
    $region48: #{fwd.1} parent=1 // pred_region
      %70 = dma.done [#allocation6], 16
    $region49: #{fwd.1} parent=1 // pred_fallthru
      _
    %v71 = vld [vmem:[%s0] sm:$0xff]
    %v72 = vld [vmem:[%s0 + $0x8] sm:$0xff]
    %v73 = vld [vmem:[%s0 + $0x10] sm:$0xff]
    %v74 = vld [vmem:[%s0 + $0x18] sm:$0xff]
    %v75 = vld [vmem:[%s0 + $0x20] sm:$0xff]
    %v76 = vld [vmem:[%s0 + $0x28] sm:$0xff]
    %v77 = vld [vmem:[%s0 + $0x30] sm:$0xff]
    %v78 = vld [vmem:[%s0 + $0x38] sm:$0xff]
    %v79 = vld [vmem:[%s0 + $0x40] sm:$0xff]
    %v80 = vld [vmem:[%s0 + $0x48] sm:$0xff]
    %v81 = vld [vmem:[%s0 + $0x50] sm:$0xff]
    %v82 = vld [vmem:[%s0 + $0x58] sm:$0xff]
    %v83 = vld [vmem:[%s0 + $0x60] sm:$0xff]
    %v84 = vld [vmem:[%s0 + $0x68] sm:$0xff]
    %v85 = vld [vmem:[%s0 + $0x70] sm:$0xff]
    %v86 = vld [vmem:[%s0 + $0x78] sm:$0xff]
    %v87 = vld [vmem:[#allocation3] sm:$0xff]
    %v88 = vld [vmem:[#allocation3 + $0x8] sm:$0xff]
    %v89 = vld [vmem:[#allocation3 + $0x10] sm:$0xff]
    %v90 = vld [vmem:[#allocation3 + $0x18] sm:$0xff]
    %v91 = vld [vmem:[#allocation3 + $0x20] sm:$0xff]
    %v92 = vld [vmem:[#allocation3 + $0x28] sm:$0xff]
    %v93 = vld [vmem:[#allocation3 + $0x30] sm:$0xff]
    %v94 = vld [vmem:[#allocation3 + $0x38] sm:$0xff]
    %v95 = vld [vmem:[#allocation3 + $0x40] sm:$0xff]
    %v96 = vld [vmem:[#allocation3 + $0x48] sm:$0xff]
    %v97 = vld [vmem:[#allocation3 + $0x50] sm:$0xff]
    %v98 = vld [vmem:[#allocation3 + $0x58] sm:$0xff]
    %v99 = vld [vmem:[#allocation3 + $0x60] sm:$0xf]
    %v100 = vld [vmem:[#allocation3 + $0x68] sm:$0xf]
    %v101 = vld [vmem:[#allocation3 + $0x70] sm:$0xf]
    %v102 = vld [vmem:[#allocation5] sm:$0x7]
    %v104 = vlaneseq
    %v105 = vshrl.u32 %v104, 7
    %v106 = vsub.s32 0, %v105
    %v107 = vrot.slane %v102, %v106
    %v108 = vlaneseq
    %v109 = vshrl.u32 %v108, 7
    %v110 = vsub.s32 1, %v109
    %v111 = vrot.slane %v102, %v110
    %v112 = vlaneseq
    %v113 = vshrl.u32 %v112, 7
    %v114 = vsub.s32 2, %v113
    %v115 = vrot.slane %v102, %v114
    %vm119 = vcmask 293888
    %v121 = vsel %vm119, %v71, 0
    %v124 = vsel %vm119, %v72, 0
    %v127 = vsel %vm119, %v73, 0
    %v130 = vsel %vm119, %v74, 0
    %v133 = vsel %vm119, %v75, 0
    %v136 = vsel %vm119, %v76, 0
    %v139 = vsel %vm119, %v77, 0
    %v142 = vsel %vm119, %v78, 0
    %v145 = vsel %vm119, %v79, 0
    %v148 = vsel %vm119, %v80, 0
    %v151 = vsel %vm119, %v81, 0
    %v154 = vsel %vm119, %v82, 0
    %v157 = vsel %vm119, %v83, 0
    %v160 = vsel %vm119, %v84, 0
    %v163 = vsel %vm119, %v85, 0
    %v166 = vsel %vm119, %v86, 0
    %vm168 = vcmask 1043456
    %v170 = vsel %vm168, %v99, 0
    %v173 = vsel %vm168, %v100, 0
    %v176 = vsel %vm168, %v101, 0
    %178 = vmatprep.subr.mxu0 %v88
    %179 = vmatpush1.msra.mxu0 %v87
    %180 = vmatprep.subr.mxu0 %v91
    %181 = vmatpush1.msra.mxu0 %v90
    %182 = vmatprep.subr.mxu0 %v94
    %183 = vmatpush1.msra.mxu0 %v93
    %184 = vmatprep.subr.mxu0 %v97
    %185 = vmatpush1.msra.mxu0 %v96
    %186 = vmatprep.subr.mxu0 %v173
    %187 = vmatpush1.msra.mxu0 %v170
    %188 = vmatprep.subr.mxu0 0.0
    %189 = vmatpush1.msra.mxu0 0.0
    %190 = vmatprep.subr.mxu0 0.0
    %191 = vmatpush1.msra.mxu0 0.0
    %192 = vmatprep.subr.mxu0 0.0
    %193 = vmatpush1.msra.mxu0 0.0
    %194 = vmatprep.subr.mxu0 0.0
    %195 = vmatpush1.msra.mxu0 0.0
    %196 = vmatprep.subr.mxu0 0.0
    %197 = vmatpush1.msra.mxu0 0.0
    %198 = vmatprep.subr.mxu0 0.0
    %199 = vmatpush1.msra.mxu0 0.0
    %200 = vmatprep.subr.mxu0 0.0
    %201 = vmatpush1.msra.mxu0 0.0
    %202 = vmatprep.subr.mxu0 0.0
    %203 = vmatpush1.msra.mxu0 0.0
    %204 = vmatprep.subr.mxu0 0.0
    %205 = vmatpush1.msra.mxu0 0.0
    %206 = vmatprep.subr.mxu0 0.0
    %207 = vmatpush1.msra.mxu0 0.0
    %208 = vmatprep.subr.mxu0 0.0
    %209 = vmatpush1.msra.mxu0 0.0
    %210 = vmatprep.subr.mxu0 0.0
    %211 = vmatpush1.msra.mxu0 0.0
    %212 = vmatprep.subr.mxu0 0.0
    %213 = vmatpush1.msra.mxu0 0.0
    %214 = vmatprep.subr.mxu0 0.0
    %215 = vmatpush1.msra.mxu0 0.0
    %216 = vmatprep.subr.mxu0 0.0
    %217 = vmatpush1.msra.mxu0 0.0
    %218 = vmatprep.subr.mxu0 0.0
    %219 = vmatpush1.msra.mxu0 0.0
    %220 = vmatprep.subr.mxu0 0.0
    %221 = vmatpush1.msra.mxu0 0.0
    %222 = vmatprep.subr.mxu0 0.0
    %223 = vmatpush1.msra.mxu0 0.0
    %224 = vmatprep.subr.mxu0 0.0
    %225 = vmatpush1.msra.mxu0 0.0
    %226 = vmatprep.subr.mxu0 0.0
    %227 = vmatpush1.msra.mxu0 0.0
    %228 = vmatprep.subr.mxu0 0.0
    %229 = vmatpush1.msra.mxu0 0.0
    %230 = vmatprep.subr.mxu0 0.0
    %231 = vmatpush1.msra.mxu0 0.0
    %232 = vmatprep.subr.mxu0 0.0
    %233 = vmatpush1.msra.mxu0 0.0
    %234 = vmatprep.subr.mxu0 0.0
    %235 = vmatpush1.msra.mxu0 0.0
    %236 = vmatprep.subr.mxu0 0.0
    %237 = vmatpush1.msra.mxu0 0.0
    %238 = vmatprep.subr.mxu0 0.0
    %239 = vmatpush1.msra.mxu0 0.0
    %240 = vmatprep.subr.mxu0 0.0
    %241 = vmatpush1.msra.mxu0 0.0
    %242 = vmatprep.mubr.f32.mxu0 0.0
    %243 = vmatmul.mubr.f32.gmra.mrb[0].mxu0 %v121
    %v244 = vpop.f32.mrb[0].mxu0
    %v245 = vadd.f32 %v107, %v244
    %v246 = vpop.f32.mrb[0].mxu0
    %v247 = vadd.f32 %v111, %v246
    %248 = vmatprep.mubr.f32.mxu0 0.0
    %249 = vmatmul.mubr.f32.gmra.mrb[0].mxu0 %v124
    %v250 = vpop.f32.mrb[0].mxu0
    %v251 = vadd.f32 %v107, %v250
    %v252 = vpop.f32.mrb[0].mxu0
    %v253 = vadd.f32 %v111, %v252
    %254 = vmatprep.mubr.f32.mxu0 0.0
    %255 = vmatmul.mubr.f32.gmra.mrb[0].mxu0 %v127
    %v256 = vpop.f32.mrb[0].mxu0
    %v257 = vadd.f32 %v107, %v256
    %v258 = vpop.f32.mrb[0].mxu0
    %v259 = vadd.f32 %v111, %v258
    %260 = vmatprep.mubr.f32.mxu0 0.0
    %261 = vmatmul.mubr.f32.gmra.mrb[0].mxu0 %v130
    %v262 = vpop.f32.mrb[0].mxu0
    %v263 = vadd.f32 %v107, %v262
    %v264 = vpop.f32.mrb[0].mxu0
    %v265 = vadd.f32 %v111, %v264
    %266 = vmatprep.mubr.f32.mxu0 0.0
    %267 = vmatmul.mubr.f32.gmra.mrb[0].mxu0 %v133
    %v268 = vpop.f32.mrb[0].mxu0
    %v269 = vadd.f32 %v107, %v268
    %v270 = vpop.f32.mrb[0].mxu0
    %v271 = vadd.f32 %v111, %v270
    %272 = vmatprep.mubr.f32.mxu0 0.0
    %273 = vmatmul.mubr.f32.gmra.mrb[0].mxu0 %v136
    %v274 = vpop.f32.mrb[0].mxu0
    %v275 = vadd.f32 %v107, %v274
    %v276 = vpop.f32.mrb[0].mxu0
    %v277 = vadd.f32 %v111, %v276
    %278 = vmatprep.mubr.f32.mxu0 0.0
    %279 = vmatmul.mubr.f32.gmra.mrb[0].mxu0 %v139
    %v280 = vpop.f32.mrb[0].mxu0
    %v281 = vadd.f32 %v107, %v280
    %v282 = vpop.f32.mrb[0].mxu0
    %v283 = vadd.f32 %v111, %v282
    %284 = vmatprep.mubr.f32.mxu0 0.0
    %285 = vmatmul.mubr.f32.gmra.mrb[0].mxu0 %v142
    %v286 = vpop.f32.mrb[0].mxu0
    %v287 = vadd.f32 %v107, %v286
    %v288 = vpop.f32.mrb[0].mxu0
    %v289 = vadd.f32 %v111, %v288
    %290 = vmatprep.mubr.f32.mxu0 0.0
    %291 = vmatmul.mubr.f32.gmra.mrb[0].mxu0 %v145
    %v292 = vpop.f32.mrb[0].mxu0
    %v293 = vadd.f32 %v107, %v292
    %v294 = vpop.f32.mrb[0].mxu0
    %v295 = vadd.f32 %v111, %v294
    %296 = vmatprep.mubr.f32.mxu0 0.0
    %297 = vmatmul.mubr.f32.gmra.mrb[0].mxu0 %v148
    %v298 = vpop.f32.mrb[0].mxu0
    %v299 = vadd.f32 %v107, %v298
    %v300 = vpop.f32.mrb[0].mxu0
    %v301 = vadd.f32 %v111, %v300
    %302 = vmatprep.mubr.f32.mxu0 0.0
    %303 = vmatmul.mubr.f32.gmra.mrb[0].mxu0 %v151
    %v304 = vpop.f32.mrb[0].mxu0
    %v305 = vadd.f32 %v107, %v304
    %v306 = vpop.f32.mrb[0].mxu0
    %v307 = vadd.f32 %v111, %v306
    %308 = vmatprep.mubr.f32.mxu0 0.0
    %309 = vmatmul.mubr.f32.gmra.mrb[0].mxu0 %v154
    %v310 = vpop.f32.mrb[0].mxu0
    %v311 = vadd.f32 %v107, %v310
    %v312 = vpop.f32.mrb[0].mxu0
    %v313 = vadd.f32 %v111, %v312
    %314 = vmatprep.mubr.f32.mxu0 0.0
    %315 = vmatmul.mubr.f32.gmra.mrb[0].mxu0 %v157
    %v316 = vpop.f32.mrb[0].mxu0
    %v317 = vadd.f32 %v107, %v316
    %v318 = vpop.f32.mrb[0].mxu0
    %v319 = vadd.f32 %v111, %v318
    %320 = vmatprep.mubr.f32.mxu0 0.0
    %321 = vmatmul.mubr.f32.gmra.mrb[0].mxu0 %v160
    %v322 = vpop.f32.mrb[0].mxu0
    %v323 = vadd.f32 %v107, %v322
    %v324 = vpop.f32.mrb[0].mxu0
    %v325 = vadd.f32 %v111, %v324
    %326 = vmatprep.mubr.f32.mxu0 0.0
    %327 = vmatmul.mubr.f32.gmra.mrb[0].mxu0 %v163
    %v328 = vpop.f32.mrb[0].mxu0
    %v329 = vadd.f32 %v107, %v328
    %v330 = vpop.f32.mrb[0].mxu0
    %v331 = vadd.f32 %v111, %v330
    %332 = vmatprep.mubr.f32.mxu0 0.0
    %333 = vmatmul.mubr.f32.gmra.mrb[0].mxu0 %v166
    %v334 = vpop.f32.mrb[0].mxu0
    %v335 = vadd.f32 %v107, %v334
    %v336 = vpop.f32.mrb[0].mxu0
    %v337 = vadd.f32 %v111, %v336
    %338 = vdwg.mxu0
    %339 = vmatprep.subr.mxu0 0.0
    %340 = vmatpush1.msra.mxu0 %v89
    %341 = vmatprep.subr.mxu0 0.0
    %342 = vmatpush1.msra.mxu0 %v92
    %343 = vmatprep.subr.mxu0 0.0
    %344 = vmatpush1.msra.mxu0 %v95
    %345 = vmatprep.subr.mxu0 0.0
    %346 = vmatpush1.msra.mxu0 %v98
    %347 = vmatprep.subr.mxu0 0.0
    %348 = vmatpush1.msra.mxu0 %v176
    %349 = vmatprep.subr.mxu0 0.0
    %350 = vmatpush1.msra.mxu0 0.0
    %351 = vmatprep.subr.mxu0 0.0
    %352 = vmatpush1.msra.mxu0 0.0
    %353 = vmatprep.subr.mxu0 0.0
    %354 = vmatpush1.msra.mxu0 0.0
    %355 = vmatprep.subr.mxu0 0.0
    %356 = vmatpush1.msra.mxu0 0.0
    %357 = vmatprep.subr.mxu0 0.0
    %358 = vmatpush1.msra.mxu0 0.0
    %359 = vmatprep.subr.mxu0 0.0
    %360 = vmatpush1.msra.mxu0 0.0
    %361 = vmatprep.subr.mxu0 0.0
    %362 = vmatpush1.msra.mxu0 0.0
    %363 = vmatprep.subr.mxu0 0.0
    %364 = vmatpush1.msra.mxu0 0.0
    %365 = vmatprep.subr.mxu0 0.0
    %366 = vmatpush1.msra.mxu0 0.0
    %367 = vmatprep.subr.mxu0 0.0
    %368 = vmatpush1.msra.mxu0 0.0
    %369 = vmatprep.subr.mxu0 0.0
    %370 = vmatpush1.msra.mxu0 0.0
    %371 = vmatprep.subr.mxu0 0.0
    %372 = vmatpush1.msra.mxu0 0.0
    %373 = vmatprep.subr.mxu0 0.0
    %374 = vmatpush1.msra.mxu0 0.0
    %375 = vmatprep.subr.mxu0 0.0
    %376 = vmatpush1.msra.mxu0 0.0
    %377 = vmatprep.subr.mxu0 0.0
    %378 = vmatpush1.msra.mxu0 0.0
    %379 = vmatprep.subr.mxu0 0.0
    %380 = vmatpush1.msra.mxu0 0.0
    %381 = vmatprep.subr.mxu0 0.0
    %382 = vmatpush1.msra.mxu0 0.0
    %383 = vmatprep.subr.mxu0 0.0
    %384 = vmatpush1.msra.mxu0 0.0
    %385 = vmatprep.subr.mxu0 0.0
    %386 = vmatpush1.msra.mxu0 0.0
    %387 = vmatprep.subr.mxu0 0.0
    %388 = vmatpush1.msra.mxu0 0.0
    %389 = vmatprep.subr.mxu0 0.0
    %390 = vmatpush1.msra.mxu0 0.0
    %391 = vmatprep.subr.mxu0 0.0
    %392 = vmatpush1.msra.mxu0 0.0
    %393 = vmatprep.subr.mxu0 0.0
    %394 = vmatpush1.msra.mxu0 0.0
    %395 = vmatprep.subr.mxu0 0.0
    %396 = vmatpush1.msra.mxu0 0.0
    %397 = vmatprep.subr.mxu0 0.0
    %398 = vmatpush1.msra.mxu0 0.0
    %399 = vmatprep.subr.mxu0 0.0
    %400 = vmatpush1.msra.mxu0 0.0
    %401 = vmatprep.subr.mxu0 0.0
    %402 = vmatpush1.msra.mxu0 0.0
    %403 = vmatprep.mubr.f32.mxu0 0.0
    %404 = vmatmul.mubr.f32.gmra.mrb[0].mxu0 %v121
    %v405 = vpop.f32.mrb[0].mxu0
    %v406 = vadd.f32 %v115, %v405
    %v407 = vpop.f32.mrb[0].mxu0
    %408 = vmatprep.mubr.f32.mxu0 0.0
    %409 = vmatmul.mubr.f32.gmra.mrb[0].mxu0 %v124
    %v410 = vpop.f32.mrb[0].mxu0
    %v411 = vadd.f32 %v115, %v410
    %v412 = vpop.f32.mrb[0].mxu0
    %413 = vmatprep.mubr.f32.mxu0 0.0
    %414 = vmatmul.mubr.f32.gmra.mrb[0].mxu0 %v127
    %v415 = vpop.f32.mrb[0].mxu0
    %v416 = vadd.f32 %v115, %v415
    %v417 = vpop.f32.mrb[0].mxu0
    %418 = vmatprep.mubr.f32.mxu0 0.0
    %419 = vmatmul.mubr.f32.gmra.mrb[0].mxu0 %v130
    %v420 = vpop.f32.mrb[0].mxu0
    %v421 = vadd.f32 %v115, %v420
    %v422 = vpop.f32.mrb[0].mxu0
    %423 = vmatprep.mubr.f32.mxu0 0.0
    %424 = vmatmul.mubr.f32.gmra.mrb[0].mxu0 %v133
    %v425 = vpop.f32.mrb[0].mxu0
    %v426 = vadd.f32 %v115, %v425
    %v427 = vpop.f32.mrb[0].mxu0
    %428 = vmatprep.mubr.f32.mxu0 0.0
    %429 = vmatmul.mubr.f32.gmra.mrb[0].mxu0 %v136
    %v430 = vpop.f32.mrb[0].mxu0
    %v431 = vadd.f32 %v115, %v430
    %v432 = vpop.f32.mrb[0].mxu0
    %433 = vmatprep.mubr.f32.mxu0 0.0
    %434 = vmatmul.mubr.f32.gmra.mrb[0].mxu0 %v139
    %v435 = vpop.f32.mrb[0].mxu0
    %v436 = vadd.f32 %v115, %v435
    %v437 = vpop.f32.mrb[0].mxu0
    %438 = vmatprep.mubr.f32.mxu0 0.0
    %439 = vmatmul.mubr.f32.gmra.mrb[0].mxu0 %v142
    %v440 = vpop.f32.mrb[0].mxu0
    %v441 = vadd.f32 %v115, %v440
    %v442 = vpop.f32.mrb[0].mxu0
    %443 = vmatprep.mubr.f32.mxu0 0.0
    %444 = vmatmul.mubr.f32.gmra.mrb[0].mxu0 %v145
    %v445 = vpop.f32.mrb[0].mxu0
    %v446 = vadd.f32 %v115, %v445
    %v447 = vpop.f32.mrb[0].mxu0
    %448 = vmatprep.mubr.f32.mxu0 0.0
    %449 = vmatmul.mubr.f32.gmra.mrb[0].mxu0 %v148
    %v450 = vpop.f32.mrb[0].mxu0
    %v451 = vadd.f32 %v115, %v450
    %v452 = vpop.f32.mrb[0].mxu0
    %453 = vmatprep.mubr.f32.mxu0 0.0
    %454 = vmatmul.mubr.f32.gmra.mrb[0].mxu0 %v151
    %v455 = vpop.f32.mrb[0].mxu0
    %v456 = vadd.f32 %v115, %v455
    %v457 = vpop.f32.mrb[0].mxu0
    %458 = vmatprep.mubr.f32.mxu0 0.0
    %459 = vmatmul.mubr.f32.gmra.mrb[0].mxu0 %v154
    %v460 = vpop.f32.mrb[0].mxu0
    %v461 = vadd.f32 %v115, %v460
    %v462 = vpop.f32.mrb[0].mxu0
    %463 = vmatprep.mubr.f32.mxu0 0.0
    %464 = vmatmul.mubr.f32.gmra.mrb[0].mxu0 %v157
    %v465 = vpop.f32.mrb[0].mxu0
    %v466 = vadd.f32 %v115, %v465
    %v467 = vpop.f32.mrb[0].mxu0
    %468 = vmatprep.mubr.f32.mxu0 0.0
    %469 = vmatmul.mubr.f32.gmra.mrb[0].mxu0 %v160
    %v470 = vpop.f32.mrb[0].mxu0
    %v471 = vadd.f32 %v115, %v470
    %v472 = vpop.f32.mrb[0].mxu0
    %473 = vmatprep.mubr.f32.mxu0 0.0
    %474 = vmatmul.mubr.f32.gmra.mrb[0].mxu0 %v163
    %v475 = vpop.f32.mrb[0].mxu0
    %v476 = vadd.f32 %v115, %v475
    %v477 = vpop.f32.mrb[0].mxu0
    %478 = vmatprep.mubr.f32.mxu0 0.0
    %479 = vmatmul.mubr.f32.gmra.mrb[0].mxu0 %v166
    %v480 = vpop.f32.mrb[0].mxu0
    %v481 = vadd.f32 %v115, %v480
    %v482 = vpop.f32.mrb[0].mxu0
    %483 = vdwg.mxu0
    %v484 = vmul.f32 %v245, %v247
    %v485 = vmul.f32 %v251, %v253
    %v486 = vmul.f32 %v257, %v259
    %v487 = vmul.f32 %v263, %v265
    %v488 = vmul.f32 %v269, %v271
    %v489 = vmul.f32 %v275, %v277
    %v490 = vmul.f32 %v281, %v283
    %v491 = vmul.f32 %v287, %v289
    %v492 = vmul.f32 %v293, %v295
    %v493 = vmul.f32 %v299, %v301
    %v494 = vmul.f32 %v305, %v307
    %v495 = vmul.f32 %v311, %v313
    %v496 = vmul.f32 %v317, %v319
    %v497 = vmul.f32 %v323, %v325
    %v498 = vmul.f32 %v329, %v331
    %v499 = vmul.f32 %v335, %v337
    %v500 = vmul.f32 %v484, %v406
    %v501 = vmul.f32 %v485, %v411
    %v502 = vmul.f32 %v486, %v416
    %v503 = vmul.f32 %v487, %v421
    %v504 = vmul.f32 %v488, %v426
    %v505 = vmul.f32 %v489, %v431
    %v506 = vmul.f32 %v490, %v436
    %v507 = vmul.f32 %v491, %v441
    %v508 = vmul.f32 %v492, %v446
    %v509 = vmul.f32 %v493, %v451
    %v510 = vmul.f32 %v494, %v456
    %v511 = vmul.f32 %v495, %v461
    %v512 = vmul.f32 %v496, %v466
    %v513 = vmul.f32 %v497, %v471
    %v514 = vmul.f32 %v498, %v476
    %v515 = vmul.f32 %v499, %v481
    %v516 = vld [vmem:[%s3] sm:$0xff]
    %v517 = vld [vmem:[%s3 + $0x8] sm:$0xff]
    %v518 = vld [vmem:[%s3 + $0x10] sm:$0xff]
    %v519 = vld [vmem:[%s3 + $0x18] sm:$0xff]
    %v520 = vld [vmem:[%s3 + $0x20] sm:$0xff]
    %v521 = vld [vmem:[%s3 + $0x28] sm:$0xff]
    %v522 = vld [vmem:[%s3 + $0x30] sm:$0xff]
    %v523 = vld [vmem:[%s3 + $0x38] sm:$0xff]
    %v524 = vld [vmem:[%s3 + $0x40] sm:$0xff]
    %v525 = vld [vmem:[%s3 + $0x48] sm:$0xff]
    %v526 = vld [vmem:[%s3 + $0x50] sm:$0xff]
    %v527 = vld [vmem:[%s3 + $0x58] sm:$0xff]
    %v528 = vld [vmem:[%s3 + $0x60] sm:$0xff]
    %v529 = vld [vmem:[%s3 + $0x68] sm:$0xff]
    %v530 = vld [vmem:[%s3 + $0x70] sm:$0xff]
    %v531 = vld [vmem:[%s3 + $0x78] sm:$0xff]
    %v532 = vld [vmem:[#allocation7] sm:$0x1]
    %v534 = vlaneseq
    %v535 = vshrl.u32 %v534, 7
    %v536 = vsub.s32 0, %v535
    %v537 = vrot.slane %v532, %v536
    %539 = vmatprep.subr.mxu0 0.0
    %540 = vmatpush1.msra.mxu0 %v516
    %541 = vmatprep.subr.mxu0 0.0
    %542 = vmatpush1.msra.mxu0 %v517
    %543 = vmatprep.subr.mxu0 0.0
    %544 = vmatpush1.msra.mxu0 %v518
    %545 = vmatprep.subr.mxu0 0.0
    %546 = vmatpush1.msra.mxu0 %v519
    %547 = vmatprep.subr.mxu0 0.0
    %548 = vmatpush1.msra.mxu0 %v520
    %549 = vmatprep.subr.mxu0 0.0
    %550 = vmatpush1.msra.mxu0 %v521
    %551 = vmatprep.subr.mxu0 0.0
    %552 = vmatpush1.msra.mxu0 %v522
    %553 = vmatprep.subr.mxu0 0.0
    %554 = vmatpush1.msra.mxu0 %v523
    %555 = vmatprep.subr.mxu0 0.0
    %556 = vmatpush1.msra.mxu0 %v524
    %557 = vmatprep.subr.mxu0 0.0
    %558 = vmatpush1.msra.mxu0 %v525
    %559 = vmatprep.subr.mxu0 0.0
    %560 = vmatpush1.msra.mxu0 %v526
    %561 = vmatprep.subr.mxu0 0.0
    %562 = vmatpush1.msra.mxu0 %v527
    %563 = vmatprep.subr.mxu0 0.0
    %564 = vmatpush1.msra.mxu0 %v528
    %565 = vmatprep.subr.mxu0 0.0
    %566 = vmatpush1.msra.mxu0 %v529
    %567 = vmatprep.subr.mxu0 0.0
    %568 = vmatpush1.msra.mxu0 %v530
    %569 = vmatprep.subr.mxu0 0.0
    %570 = vmatpush1.msra.mxu0 %v531
    %571 = vmatprep.subr.mxu0 0.0
    %572 = vmatpush1.msra.mxu0 0.0
    %573 = vmatprep.subr.mxu0 0.0
    %574 = vmatpush1.msra.mxu0 0.0
    %575 = vmatprep.subr.mxu0 0.0
    %576 = vmatpush1.msra.mxu0 0.0
    %577 = vmatprep.subr.mxu0 0.0
    %578 = vmatpush1.msra.mxu0 0.0
    %579 = vmatprep.subr.mxu0 0.0
    %580 = vmatpush1.msra.mxu0 0.0
    %581 = vmatprep.subr.mxu0 0.0
    %582 = vmatpush1.msra.mxu0 0.0
    %583 = vmatprep.subr.mxu0 0.0
    %584 = vmatpush1.msra.mxu0 0.0
    %585 = vmatprep.subr.mxu0 0.0
    %586 = vmatpush1.msra.mxu0 0.0
    %587 = vmatprep.subr.mxu0 0.0
    %588 = vmatpush1.msra.mxu0 0.0
    %589 = vmatprep.subr.mxu0 0.0
    %590 = vmatpush1.msra.mxu0 0.0
    %591 = vmatprep.subr.mxu0 0.0
    %592 = vmatpush1.msra.mxu0 0.0
    %593 = vmatprep.subr.mxu0 0.0
    %594 = vmatpush1.msra.mxu0 0.0
    %595 = vmatprep.subr.mxu0 0.0
    %596 = vmatpush1.msra.mxu0 0.0
    %597 = vmatprep.subr.mxu0 0.0
    %598 = vmatpush1.msra.mxu0 0.0
    %599 = vmatprep.subr.mxu0 0.0
    %600 = vmatpush1.msra.mxu0 0.0
    %601 = vmatprep.subr.mxu0 0.0
    %602 = vmatpush1.msra.mxu0 0.0
    %603 = vmatprep.mubr.f32.mxu0 0.0
    %604 = vmatmul.mubr.f32.gmra.mrb[0].mxu0 %v500
    %v605 = vpop.f32.mrb[0].mxu0
    %v606 = vadd.f32 %v537, %v605
    %v607 = vpop.f32.mrb[0].mxu0
    %608 = vmatprep.mubr.f32.mxu0 0.0
    %609 = vmatmul.mubr.f32.gmra.mrb[0].mxu0 %v501
    %v610 = vpop.f32.mrb[0].mxu0
    %v611 = vadd.f32 %v537, %v610
    %v612 = vpop.f32.mrb[0].mxu0
    %613 = vmatprep.mubr.f32.mxu0 0.0
    %614 = vmatmul.mubr.f32.gmra.mrb[0].mxu0 %v502
    %v615 = vpop.f32.mrb[0].mxu0
    %v616 = vadd.f32 %v537, %v615
    %v617 = vpop.f32.mrb[0].mxu0
    %618 = vmatprep.mubr.f32.mxu0 0.0
    %619 = vmatmul.mubr.f32.gmra.mrb[0].mxu0 %v503
    %v620 = vpop.f32.mrb[0].mxu0
    %v621 = vadd.f32 %v537, %v620
    %v622 = vpop.f32.mrb[0].mxu0
    %623 = vmatprep.mubr.f32.mxu0 0.0
    %624 = vmatmul.mubr.f32.gmra.mrb[0].mxu0 %v504
    %v625 = vpop.f32.mrb[0].mxu0
    %v626 = vadd.f32 %v537, %v625
    %v627 = vpop.f32.mrb[0].mxu0
    %628 = vmatprep.mubr.f32.mxu0 0.0
    %629 = vmatmul.mubr.f32.gmra.mrb[0].mxu0 %v505
    %v630 = vpop.f32.mrb[0].mxu0
    %v631 = vadd.f32 %v537, %v630
    %v632 = vpop.f32.mrb[0].mxu0
    %633 = vmatprep.mubr.f32.mxu0 0.0
    %634 = vmatmul.mubr.f32.gmra.mrb[0].mxu0 %v506
    %v635 = vpop.f32.mrb[0].mxu0
    %v636 = vadd.f32 %v537, %v635
    %v637 = vpop.f32.mrb[0].mxu0
    %638 = vmatprep.mubr.f32.mxu0 0.0
    %639 = vmatmul.mubr.f32.gmra.mrb[0].mxu0 %v507
    %v640 = vpop.f32.mrb[0].mxu0
    %v641 = vadd.f32 %v537, %v640
    %v642 = vpop.f32.mrb[0].mxu0
    %643 = vmatprep.mubr.f32.mxu0 0.0
    %644 = vmatmul.mubr.f32.gmra.mrb[0].mxu0 %v508
    %v645 = vpop.f32.mrb[0].mxu0
    %v646 = vadd.f32 %v537, %v645
    %v647 = vpop.f32.mrb[0].mxu0
    %648 = vmatprep.mubr.f32.mxu0 0.0
    %649 = vmatmul.mubr.f32.gmra.mrb[0].mxu0 %v509
    %v650 = vpop.f32.mrb[0].mxu0
    %v651 = vadd.f32 %v537, %v650
    %v652 = vpop.f32.mrb[0].mxu0
    %653 = vmatprep.mubr.f32.mxu0 0.0
    %654 = vmatmul.mubr.f32.gmra.mrb[0].mxu0 %v510
    %v655 = vpop.f32.mrb[0].mxu0
    %v656 = vadd.f32 %v537, %v655
    %v657 = vpop.f32.mrb[0].mxu0
    %658 = vmatprep.mubr.f32.mxu0 0.0
    %659 = vmatmul.mubr.f32.gmra.mrb[0].mxu0 %v511
    %v660 = vpop.f32.mrb[0].mxu0
    %v661 = vadd.f32 %v537, %v660
    %v662 = vpop.f32.mrb[0].mxu0
    %663 = vmatprep.mubr.f32.mxu0 0.0
    %664 = vmatmul.mubr.f32.gmra.mrb[0].mxu0 %v512
    %v665 = vpop.f32.mrb[0].mxu0
    %v666 = vadd.f32 %v537, %v665
    %v667 = vpop.f32.mrb[0].mxu0
    %668 = vmatprep.mubr.f32.mxu0 0.0
    %669 = vmatmul.mubr.f32.gmra.mrb[0].mxu0 %v513
    %v670 = vpop.f32.mrb[0].mxu0
    %v671 = vadd.f32 %v537, %v670
    %v672 = vpop.f32.mrb[0].mxu0
    %673 = vmatprep.mubr.f32.mxu0 0.0
    %674 = vmatmul.mubr.f32.gmra.mrb[0].mxu0 %v514
    %v675 = vpop.f32.mrb[0].mxu0
    %v676 = vadd.f32 %v537, %v675
    %v677 = vpop.f32.mrb[0].mxu0
    %678 = vmatprep.mubr.f32.mxu0 0.0
    %679 = vmatmul.mubr.f32.gmra.mrb[0].mxu0 %v515
    %v680 = vpop.f32.mrb[0].mxu0
    %v681 = vadd.f32 %v537, %v680
    %v682 = vpop.f32.mrb[0].mxu0
    %683 = vdwg.mxu0
    %v684 = vmax.f32 %v606, 0.0
    %v685 = vmax.f32 %v611, 0.0
    %v686 = vmax.f32 %v616, 0.0
    %v687 = vmax.f32 %v621, 0.0
    %v688 = vmax.f32 %v626, 0.0
    %v689 = vmax.f32 %v631, 0.0
    %v690 = vmax.f32 %v636, 0.0
    %v691 = vmax.f32 %v641, 0.0
    %v692 = vmax.f32 %v646, 0.0
    %v693 = vmax.f32 %v651, 0.0
    %v694 = vmax.f32 %v656, 0.0
    %v695 = vmax.f32 %v661, 0.0
    %v696 = vmax.f32 %v666, 0.0
    %v697 = vmax.f32 %v671, 0.0
    %v698 = vmax.f32 %v676, 0.0
    %v699 = vmax.f32 %v681, 0.0
    %v700 = vld [vmem:[%s5] sm:$0xff]
    %v701 = vld [vmem:[%s5 + $0x8] sm:$0xff]
    %v702 = vld [vmem:[%s5 + $0x10] sm:$0xff]
    %v703 = vld [vmem:[%s5 + $0x18] sm:$0xff]
    %v704 = vld [vmem:[%s6] sm:$0x1]
    %v706 = vlaneseq
    %v707 = vshrl.u32 %v706, 7
    %v708 = vsub.s32 0, %v707
    %v709 = vrot.slane %v704, %v708
    %vm711 = vcmask 261120
    %v713 = vsel %vm711, %v684, 0
    %v716 = vsel %vm711, %v685, 0
    %v719 = vsel %vm711, %v686, 0
    %v722 = vsel %vm711, %v687, 0
    %v725 = vsel %vm711, %v688, 0
    %v728 = vsel %vm711, %v689, 0
    %v731 = vsel %vm711, %v690, 0
    %v734 = vsel %vm711, %v691, 0
    %v737 = vsel %vm711, %v692, 0
    %v740 = vsel %vm711, %v693, 0
    %v743 = vsel %vm711, %v694, 0
    %v746 = vsel %vm711, %v695, 0
    %v749 = vsel %vm711, %v696, 0
    %v752 = vsel %vm711, %v697, 0
    %v755 = vsel %vm711, %v698, 0
    %v758 = vsel %vm711, %v699, 0
    %760 = vmatprep.subr.mxu0 0.0
    %761 = vmatpush1.msra.mxu0 %v700
    %762 = vmatprep.subr.mxu0 0.0
    %763 = vmatpush1.msra.mxu0 %v701
    %764 = vmatprep.subr.mxu0 0.0
    %765 = vmatpush1.msra.mxu0 %v702
    %766 = vmatprep.subr.mxu0 0.0
    %767 = vmatpush1.msra.mxu0 %v703
    %768 = vmatprep.subr.mxu0 0.0
    %769 = vmatpush1.msra.mxu0 0.0
    %770 = vmatprep.subr.mxu0 0.0
    %771 = vmatpush1.msra.mxu0 0.0
    %772 = vmatprep.subr.mxu0 0.0
    %773 = vmatpush1.msra.mxu0 0.0
    %774 = vmatprep.subr.mxu0 0.0
    %775 = vmatpush1.msra.mxu0 0.0
    %776 = vmatprep.subr.mxu0 0.0
    %777 = vmatpush1.msra.mxu0 0.0
    %778 = vmatprep.subr.mxu0 0.0
    %779 = vmatpush1.msra.mxu0 0.0
    %780 = vmatprep.subr.mxu0 0.0
    %781 = vmatpush1.msra.mxu0 0.0
    %782 = vmatprep.subr.mxu0 0.0
    %783 = vmatpush1.msra.mxu0 0.0
    %784 = vmatprep.subr.mxu0 0.0
    %785 = vmatpush1.msra.mxu0 0.0
    %786 = vmatprep.subr.mxu0 0.0
    %787 = vmatpush1.msra.mxu0 0.0
    %788 = vmatprep.subr.mxu0 0.0
    %789 = vmatpush1.msra.mxu0 0.0
    %790 = vmatprep.subr.mxu0 0.0
    %791 = vmatpush1.msra.mxu0 0.0
    %792 = vmatprep.subr.mxu0 0.0
    %793 = vmatpush1.msra.mxu0 0.0
    %794 = vmatprep.subr.mxu0 0.0
    %795 = vmatpush1.msra.mxu0 0.0
    %796 = vmatprep.subr.mxu0 0.0
    %797 = vmatpush1.msra.mxu0 0.0
    %798 = vmatprep.subr.mxu0 0.0
    %799 = vmatpush1.msra.mxu0 0.0
    %800 = vmatprep.subr.mxu0 0.0
    %801 = vmatpush1.msra.mxu0 0.0
    %802 = vmatprep.subr.mxu0 0.0
    %803 = vmatpush1.msra.mxu0 0.0
    %804 = vmatprep.subr.mxu0 0.0
    %805 = vmatpush1.msra.mxu0 0.0
    %806 = vmatprep.subr.mxu0 0.0
    %807 = vmatpush1.msra.mxu0 0.0
    %808 = vmatprep.subr.mxu0 0.0
    %809 = vmatpush1.msra.mxu0 0.0
    %810 = vmatprep.subr.mxu0 0.0
    %811 = vmatpush1.msra.mxu0 0.0
    %812 = vmatprep.subr.mxu0 0.0
    %813 = vmatpush1.msra.mxu0 0.0
    %814 = vmatprep.subr.mxu0 0.0
    %815 = vmatpush1.msra.mxu0 0.0
    %816 = vmatprep.subr.mxu0 0.0
    %817 = vmatpush1.msra.mxu0 0.0
    %818 = vmatprep.subr.mxu0 0.0
    %819 = vmatpush1.msra.mxu0 0.0
    %820 = vmatprep.subr.mxu0 0.0
    %821 = vmatpush1.msra.mxu0 0.0
    %822 = vmatprep.subr.mxu0 0.0
    %823 = vmatpush1.msra.mxu0 0.0
    %824 = vmatprep.mubr.f32.mxu0 0.0
    %825 = vmatmul.mubr.f32.gmra.mrb[0].mxu0 %v713
    %v826 = vpop.f32.mrb[0].mxu0
    %v827 = vadd.f32 %v709, %v826
    %v828 = vpop.f32.mrb[0].mxu0
    %829 = vmatprep.mubr.f32.mxu0 0.0
    %830 = vmatmul.mubr.f32.gmra.mrb[0].mxu0 %v716
    %v831 = vpop.f32.mrb[0].mxu0
    %v832 = vadd.f32 %v709, %v831
    %v833 = vpop.f32.mrb[0].mxu0
    %834 = vmatprep.mubr.f32.mxu0 0.0
    %835 = vmatmul.mubr.f32.gmra.mrb[0].mxu0 %v719
    %v836 = vpop.f32.mrb[0].mxu0
    %v837 = vadd.f32 %v709, %v836
    %v838 = vpop.f32.mrb[0].mxu0
    %839 = vmatprep.mubr.f32.mxu0 0.0
    %840 = vmatmul.mubr.f32.gmra.mrb[0].mxu0 %v722
    %v841 = vpop.f32.mrb[0].mxu0
    %v842 = vadd.f32 %v709, %v841
    %v843 = vpop.f32.mrb[0].mxu0
    %844 = vmatprep.mubr.f32.mxu0 0.0
    %845 = vmatmul.mubr.f32.gmra.mrb[0].mxu0 %v725
    %v846 = vpop.f32.mrb[0].mxu0
    %v847 = vadd.f32 %v709, %v846
    %v848 = vpop.f32.mrb[0].mxu0
    %849 = vmatprep.mubr.f32.mxu0 0.0
    %850 = vmatmul.mubr.f32.gmra.mrb[0].mxu0 %v728
    %v851 = vpop.f32.mrb[0].mxu0
    %v852 = vadd.f32 %v709, %v851
    %v853 = vpop.f32.mrb[0].mxu0
    %854 = vmatprep.mubr.f32.mxu0 0.0
    %855 = vmatmul.mubr.f32.gmra.mrb[0].mxu0 %v731
    %v856 = vpop.f32.mrb[0].mxu0
    %v857 = vadd.f32 %v709, %v856
    %v858 = vpop.f32.mrb[0].mxu0
    %859 = vmatprep.mubr.f32.mxu0 0.0
    %860 = vmatmul.mubr.f32.gmra.mrb[0].mxu0 %v734
    %v861 = vpop.f32.mrb[0].mxu0
    %v862 = vadd.f32 %v709, %v861
    %v863 = vpop.f32.mrb[0].mxu0
    %864 = vmatprep.mubr.f32.mxu0 0.0
    %865 = vmatmul.mubr.f32.gmra.mrb[0].mxu0 %v737
    %v866 = vpop.f32.mrb[0].mxu0
    %v867 = vadd.f32 %v709, %v866
    %v868 = vpop.f32.mrb[0].mxu0
    %869 = vmatprep.mubr.f32.mxu0 0.0
    %870 = vmatmul.mubr.f32.gmra.mrb[0].mxu0 %v740
    %v871 = vpop.f32.mrb[0].mxu0
    %v872 = vadd.f32 %v709, %v871
    %v873 = vpop.f32.mrb[0].mxu0
    %874 = vmatprep.mubr.f32.mxu0 0.0
    %875 = vmatmul.mubr.f32.gmra.mrb[0].mxu0 %v743
    %v876 = vpop.f32.mrb[0].mxu0
    %v877 = vadd.f32 %v709, %v876
    %v878 = vpop.f32.mrb[0].mxu0
    %879 = vmatprep.mubr.f32.mxu0 0.0
    %880 = vmatmul.mubr.f32.gmra.mrb[0].mxu0 %v746
    %v881 = vpop.f32.mrb[0].mxu0
    %v882 = vadd.f32 %v709, %v881
    %v883 = vpop.f32.mrb[0].mxu0
    %884 = vmatprep.mubr.f32.mxu0 0.0
    %885 = vmatmul.mubr.f32.gmra.mrb[0].mxu0 %v749
    %v886 = vpop.f32.mrb[0].mxu0
    %v887 = vadd.f32 %v709, %v886
    %v888 = vpop.f32.mrb[0].mxu0
    %889 = vmatprep.mubr.f32.mxu0 0.0
    %890 = vmatmul.mubr.f32.gmra.mrb[0].mxu0 %v752
    %v891 = vpop.f32.mrb[0].mxu0
    %v892 = vadd.f32 %v709, %v891
    %v893 = vpop.f32.mrb[0].mxu0
    %894 = vmatprep.mubr.f32.mxu0 0.0
    %895 = vmatmul.mubr.f32.gmra.mrb[0].mxu0 %v755
    %v896 = vpop.f32.mrb[0].mxu0
    %v897 = vadd.f32 %v709, %v896
    %v898 = vpop.f32.mrb[0].mxu0
    %899 = vmatprep.mubr.f32.mxu0 0.0
    %900 = vmatmul.mubr.f32.gmra.mrb[0].mxu0 %v758
    %v901 = vpop.f32.mrb[0].mxu0
    %v902 = vadd.f32 %v709, %v901
    %v903 = vpop.f32.mrb[0].mxu0
    %904 = vdwg.mxu0
    %v905 = vmax.f32 %v827, 0.0
    %v906 = vmax.f32 %v832, 0.0
    %v907 = vmax.f32 %v837, 0.0
    %v908 = vmax.f32 %v842, 0.0
    %v909 = vmax.f32 %v847, 0.0
    %v910 = vmax.f32 %v852, 0.0
    %v911 = vmax.f32 %v857, 0.0
    %v912 = vmax.f32 %v862, 0.0
    %v913 = vmax.f32 %v867, 0.0
    %v914 = vmax.f32 %v872, 0.0
    %v915 = vmax.f32 %v877, 0.0
    %v916 = vmax.f32 %v882, 0.0
    %v917 = vmax.f32 %v887, 0.0
    %v918 = vmax.f32 %v892, 0.0
    %v919 = vmax.f32 %v897, 0.0
    %v920 = vmax.f32 %v902, 0.0
    %v921 = vld [vmem:[%s7] sm:$0x1]
    %v923 = vlaneseq
    %v924 = vshrl.u32 %v923, 7
    %v925 = vsub.s32 0, %v924
    %v926 = vrot.slane %v921, %v925
    %v928 = vmul.f32 %v905, %v926
    %v929 = vmul.f32 %v906, %v926
    %v930 = vmul.f32 %v907, %v926
    %v931 = vmul.f32 %v908, %v926
    %v932 = vmul.f32 %v909, %v926
    %v933 = vmul.f32 %v910, %v926
    %v934 = vmul.f32 %v911, %v926
    %v935 = vmul.f32 %v912, %v926
    %v936 = vmul.f32 %v913, %v926
    %v937 = vmul.f32 %v914, %v926
    %v938 = vmul.f32 %v915, %v926
    %v939 = vmul.f32 %v916, %v926
    %v940 = vmul.f32 %v917, %v926
    %v941 = vmul.f32 %v918, %v926
    %v942 = vmul.f32 %v919, %v926
    %v943 = vmul.f32 %v920, %v926
    %v944 = vsel %vm711, %v928, 0.0
    %945 = vadd.xlane.f32.xlu0 %v944
    %v946 = vpop.xlane.xlu0 %945
    %v947 = vsel %vm711, %v929, 0.0
    %948 = vadd.xlane.f32.xlu0 %v947
    %v949 = vpop.xlane.xlu0 %948
    %v950 = vsel %vm711, %v930, 0.0
    %951 = vadd.xlane.f32.xlu0 %v950
    %v952 = vpop.xlane.xlu0 %951
    %v953 = vsel %vm711, %v931, 0.0
    %954 = vadd.xlane.f32.xlu0 %v953
    %v955 = vpop.xlane.xlu0 %954
    %v956 = vsel %vm711, %v932, 0.0
    %957 = vadd.xlane.f32.xlu0 %v956
    %v958 = vpop.xlane.xlu0 %957
    %v959 = vsel %vm711, %v933, 0.0
    %960 = vadd.xlane.f32.xlu0 %v959
    %v961 = vpop.xlane.xlu0 %960
    %v962 = vsel %vm711, %v934, 0.0
    %963 = vadd.xlane.f32.xlu0 %v962
    %v964 = vpop.xlane.xlu0 %963
    %v965 = vsel %vm711, %v935, 0.0
    %966 = vadd.xlane.f32.xlu0 %v965
    %v967 = vpop.xlane.xlu0 %966
    %v968 = vsel %vm711, %v936, 0.0
    %969 = vadd.xlane.f32.xlu0 %v968
    %v970 = vpop.xlane.xlu0 %969
    %v971 = vsel %vm711, %v937, 0.0
    %972 = vadd.xlane.f32.xlu0 %v971
    %v973 = vpop.xlane.xlu0 %972
    %v974 = vsel %vm711, %v938, 0.0
    %975 = vadd.xlane.f32.xlu0 %v974
    %v976 = vpop.xlane.xlu0 %975
    %v977 = vsel %vm711, %v939, 0.0
    %978 = vadd.xlane.f32.xlu0 %v977
    %v979 = vpop.xlane.xlu0 %978
    %v980 = vsel %vm711, %v940, 0.0
    %981 = vadd.xlane.f32.xlu0 %v980
    %v982 = vpop.xlane.xlu0 %981
    %v983 = vsel %vm711, %v941, 0.0
    %984 = vadd.xlane.f32.xlu0 %v983
    %v985 = vpop.xlane.xlu0 %984
    %v986 = vsel %vm711, %v942, 0.0
    %987 = vadd.xlane.f32.xlu0 %v986
    %v988 = vpop.xlane.xlu0 %987
    %v989 = vsel %vm711, %v943, 0.0
    %990 = vadd.xlane.f32.xlu0 %v989
    %v991 = vpop.xlane.xlu0 %990
    %v992 = vld [vmem:[#allocation2] sm:$0x1]
    %v994 = vlaneseq
    %v995 = vshrl.u32 %v994, 7
    %v996 = vsub.s32 0, %v995
    %v997 = vrot.slane %v992, %v996
    %v999 = vadd.f32 %v946, %v997
    %v1000 = vadd.f32 %v949, %v997
    %v1001 = vadd.f32 %v952, %v997
    %v1002 = vadd.f32 %v955, %v997
    %v1003 = vadd.f32 %v958, %v997
    %v1004 = vadd.f32 %v961, %v997
    %v1005 = vadd.f32 %v964, %v997
    %v1006 = vadd.f32 %v967, %v997
    %v1007 = vadd.f32 %v970, %v997
    %v1008 = vadd.f32 %v973, %v997
    %v1009 = vadd.f32 %v976, %v997
    %v1010 = vadd.f32 %v979, %v997
    %v1011 = vadd.f32 %v982, %v997
    %v1012 = vadd.f32 %v985, %v997
    %v1013 = vadd.f32 %v988, %v997
    %v1014 = vadd.f32 %v991, %v997
    %1015 = vxpose.xlu0.b32.start [1/16] %v999, 128
    %1016 = vxpose.xlu0.b32.cont [2/16] %v1000, 128
    %1017 = vxpose.xlu0.b32.cont [3/16] %v1001, 128
    %1018 = vxpose.xlu0.b32.cont [4/16] %v1002, 128
    %1019 = vxpose.xlu0.b32.cont [5/16] %v1003, 128
    %1020 = vxpose.xlu0.b32.cont [6/16] %v1004, 128
    %1021 = vxpose.xlu0.b32.cont [7/16] %v1005, 128
    %1022 = vxpose.xlu0.b32.cont [8/16] %v1006, 128
    %1023 = vxpose.xlu0.b32.cont [9/16] %v1007, 128
    %1024 = vxpose.xlu0.b32.cont [10/16] %v1008, 128
    %1025 = vxpose.xlu0.b32.cont [11/16] %v1009, 128
    %1026 = vxpose.xlu0.b32.cont [12/16] %v1010, 128
    %1027 = vxpose.xlu0.b32.cont [13/16] %v1011, 128
    %1028 = vxpose.xlu0.b32.cont [14/16] %v1012, 128
    %1029 = vxpose.xlu0.b32.cont [15/16] %v1013, 128
    %1030 = vxpose.xlu0.b32.end [16/16] %v1014, 128
    %v1031 = vpop.trf.xlu0
    %v1032 = vpop.trf.xlu0
    %v1033 = vpop.trf.xlu0
    %v1034 = vpop.trf.xlu0
    %v1035 = vpop.trf.xlu0
    %v1036 = vpop.trf.xlu0
    %v1037 = vpop.trf.xlu0
    %v1038 = vpop.trf.xlu0
    %v1039 = vpop.trf.xlu0
    %v1040 = vpop.trf.xlu0
    %v1041 = vpop.trf.xlu0
    %v1042 = vpop.trf.xlu0
    %v1043 = vpop.trf.xlu0
    %v1044 = vpop.trf.xlu0
    %v1045 = vpop.trf.xlu0
    %v1046 = vpop.trf.xlu0
    %1047 = vst [vmem:[%s9] sm:$0x1] %v1031
    // Predicated region
    $region50: #{fwd.1} parent=1 // pred_check
      _
    $region51: #{fwd.1} parent=1 // pred_check_branch
      %1049 = sbr.rel (0) target = $region53
    $region52: #{fwd.1} parent=1 // pred_region
      _
    $region53: #{fwd.1} parent=1 // pred_fallthru
      _
    // Predicated region
    $region54: #{fwd.1} parent=1 // pred_check
      _
    $region55: #{fwd.1} parent=1 // pred_check_branch
      %1051 = sbr.rel (0) target = $region57
    $region56: #{fwd.1} parent=1 // pred_region
      _
    $region57: #{fwd.1} parent=1 // pred_fallthru
      _
    %1052 = vsyncpa [#allocation4], 1
    %1053 = vsyncpa [#allocation6], 1

</llo_original>
